<compile_context>
chip_gen: v6e
topology: v6e:2x2x1
jax: 0.10.0
libtpu: 0.0.40
codegen_flags: <defaults>
</compile_context>

<pallas_src>
import math

import jax
import jax.numpy as jnp
from jax import lax
from jax.experimental import pallas as pl
from jax.experimental.pallas import tpu as pltpu


def _gcn_kernel(inp_ref, adj_ref, w1_ref, w2_ref, out_ref):
    B, Np, Cp = inp_ref.shape
    Hp = w1_ref.shape[1]
    Ep = w2_ref.shape[1]

    inp = inp_ref[...]      # (B, Np, Cp)
    adj = adj_ref[...]      # (B, Np, Np)
    w1 = w1_ref[...]        # (Cp, Hp)
    w2 = w2_ref[...]        # (Hp, Ep)

    # ---- gc1: adj @ (inp @ W1) ----
    # Weight matmul on the folded (B*Np, Cp) view: one big MXU problem
    # instead of B row-starved ones.
    support1 = jnp.dot(inp.reshape(B * Np, Cp), w1,
                       preferred_element_type=jnp.float32).reshape(B, Np, Hp)
    h1 = jnp.einsum("bij,bjh->bih", adj, support1,
                    preferred_element_type=jnp.float32)

    # ---- LeakyReLU(0.2): single VPU max ----
    h1 = jnp.maximum(h1, 0.2 * h1)

    # ---- gc2: adj @ (h1 @ W2) ----
    support2 = jnp.dot(h1.reshape(B * Np, Hp), w2,
                       preferred_element_type=jnp.float32).reshape(B, Np, Ep)
    h2 = jnp.einsum("bij,bjh->bih", adj, support2,
                    preferred_element_type=jnp.float32)

    # ---- l2norm over last dim (torch: x / (sqrt(sum x^2) + 1e-12)) ----
    # Single EUP rsqrt; eps inside the sqrt argument so zero (padded) rows
    # produce 0 instead of NaN.
    sumsq = jnp.sum(h2 * h2, axis=-1, keepdims=True)
    inv = lax.rsqrt(sumsq + 1e-24)
    out_ref[...] = (h2 * inv).astype(out_ref.dtype)


def _round_up(x, m):
    return ((x + m - 1) // m) * m


def _pad_to(x, shape):
    """Zero-pad trailing dims of x up to `shape` (no-op if already that shape)."""
    if x.shape == shape:
        return x
    pads = [(0, t - s) for s, t in zip(x.shape, shape)]
    return jnp.pad(x, pads)


def pad_gcn_weights(w1, w2):
    """Pad weights to lane-aligned shapes once (call-invariant; hoist out of the
    per-forward path)."""
    C, H = w1.shape
    E = w2.shape[1]
    Cp, Hp, Ep = _round_up(C, 128), _round_up(H, 128), _round_up(E, 128)
    w1_p = _pad_to(w1.astype(jnp.float32), (Cp, Hp))
    w2_p = _pad_to(w2.astype(jnp.float32), (Hp, Ep))
    return w1_p, w2_p, (C, H, E)


def gcn_forward(inp, adj, w1, w2):
    """GCN forward. inp: (N, C) or (B, N, C); adj: (N, N) or (B, N, N)."""
    squeeze_batch = inp.ndim == 2
    if squeeze_batch:
        inp = inp[None]
        adj = adj[None]
    B, N, C = inp.shape
    H = w1.shape[1]
    E = w2.shape[1]

    # Row dim -> multiple of 8 (sublane), feature dims -> multiple of 128 (lane).
    # Padding is only materialized when the shapes are actually misaligned.
    Np = _round_up(N, 8)
    Cp = _round_up(C, 128)
    Hp = _round_up(H, 128)
    Ep = _round_up(E, 128)

    f32 = jnp.float32
    inp_p = _pad_to(inp.astype(f32), (B, Np, Cp))
    adj_p = _pad_to(adj.astype(f32), (B, Np, Np))
    w1_p = _pad_to(w1.astype(f32), (Cp, Hp))
    w2_p = _pad_to(w2.astype(f32), (Hp, Ep))

    flops = 2 * B * (Np * Cp * Hp + Np * Np * Hp + Np * Hp * Ep + Np * Np * Ep)
    bytes_accessed = 4 * (B * Np * Cp + B * Np * Np + Cp * Hp + Hp * Ep + B * Np * Ep)
    cost = pl.CostEstimate(
        flops=flops, transcendentals=B * Np, bytes_accessed=bytes_accessed)

    # Single grid step: the whole batch is one VMEM-resident problem.
    out_p = pl.pallas_call(
        _gcn_kernel,
        out_shape=jax.ShapeDtypeStruct((B, Np, Ep), f32),
        grid=(1,),
        in_specs=[
            pl.BlockSpec((B, Np, Cp), lambda i: (0, 0, 0)),   # all features
            pl.BlockSpec((B, Np, Np), lambda i: (0, 0, 0)),   # all adjacencies
            pl.BlockSpec((Cp, Hp), lambda i: (0, 0)),         # shared weight 1
            pl.BlockSpec((Hp, Ep), lambda i: (0, 0)),         # shared weight 2
        ],
        out_specs=pl.BlockSpec((B, Np, Ep), lambda i: (0, 0, 0)),
        compiler_params=pltpu.CompilerParams(
            dimension_semantics=("arbitrary",)),
        cost_estimate=cost,
    )(inp_p, adj_p, w1_p, w2_p)

    out = out_p[:, :N, :E]
    if squeeze_batch:
        out = out[0]
    return out


def init_gcn_params(key, in_channel, embed_size):
    """Mirrors GraphConvolution.reset_parameters: uniform(-stdv, stdv),
    stdv = 1/sqrt(out_features), no bias."""
    k1, k2 = jax.random.split(key)
    e_half = embed_size // 2
    stdv1 = 1.0 / math.sqrt(e_half)
    stdv2 = 1.0 / math.sqrt(embed_size)
    w1 = jax.random.uniform(k1, (in_channel, e_half), jnp.float32, -stdv1, stdv1)
    w2 = jax.random.uniform(k2, (e_half, embed_size), jnp.float32, -stdv2, stdv2)
    return w1, w2


def gcn_reference(inp, adj, w1, w2):
    """Pure-JAX reference of the PyTorch forward (supports batched or 2-D)."""
    h1 = adj @ (inp @ w1)
    h1 = jnp.where(h1 >= 0, h1, 0.2 * h1)
    h2 = adj @ (h1 @ w2)
    norm = jnp.linalg.norm(h2, axis=-1, keepdims=True) + 1e-12
    return h2 / norm


if __name__ == "__main__":
    # Lane-dense shapes (E and E/2 multiples of 128), small batch of graphs.
    num_classes = 16
    in_channel = 128
    embed_size = 256
    batch = 4

    key = jax.random.PRNGKey(0)
    k_inp, k_adj, k_params = jax.random.split(key, 3)

    inp = jax.random.normal(k_inp, (batch, num_classes, in_channel), jnp.float32)
    a = jax.random.uniform(k_adj, (batch, num_classes, num_classes), jnp.float32)
    adj = (a + jnp.swapaxes(a, -1, -2)) / (2.0 * num_classes)

    w1, w2 = init_gcn_params(k_params, in_channel, embed_size)

    out = jax.block_until_ready(gcn_forward(inp, adj, w1, w2))
    ref = gcn_reference(inp, adj, w1, w2)
    assert out.shape == (batch, num_classes, embed_size)
    assert jnp.allclose(out, ref, atol=1e-5, rtol=1e-5)

    # Second check: single (unbatched) problem with non-aligned dims to
    # exercise the zero-padding path (N=10, C=40, E=48).
    inp2 = jax.random.normal(k_inp, (10, 40), jnp.float32)
    a2 = jax.random.uniform(k_adj, (10, 10), jnp.float32)
    adj2 = (a2 + a2.T) / 20.0
    w1b, w2b = init_gcn_params(k_params, 40, 48)
    out2 = jax.block_until_ready(gcn_forward(inp2, adj2, w1b, w2b))
    ref2 = gcn_reference(inp2, adj2, w1b, w2b)
    assert out2.shape == (10, 48)
    assert jnp.allclose(out2, ref2, atol=1e-5, rtol=1e-5)

    print("KERNEL_OK")
</pallas_src>

<mosaic_0001>
module attributes {stable_mosaic.version = 11 : i64} {
  func.func @_gcn_kernel(%arg0: i32, %arg1: memref<4x16x128xf32, #tpu.memory_space<vmem>>, %arg2: memref<4x16x16xf32, #tpu.memory_space<vmem>>, %arg3: memref<128x128xf32, #tpu.memory_space<vmem>>, %arg4: memref<128x256xf32, #tpu.memory_space<vmem>>, %arg5: memref<4x16x256xf32, #tpu.memory_space<vmem>>) attributes {dimension_semantics = [#tpu.dimension_semantics<arbitrary>], iteration_bounds = array<i64: 1>, scalar_prefetch = 0 : i64, scratch_operands = 0 : i64, tpu.core_type = #tpu.core_type<tc>, window_params = [{pipeline_mode = #tpu.pipeline_mode<synchronous>, transform_indices = @transform_0, window_bounds = array<i64: 4, 16, 128>}, {pipeline_mode = #tpu.pipeline_mode<synchronous>, transform_indices = @transform_1, window_bounds = array<i64: 4, 16, 16>}, {pipeline_mode = #tpu.pipeline_mode<synchronous>, transform_indices = @transform_2, window_bounds = array<i64: 128, 128>}, {pipeline_mode = #tpu.pipeline_mode<synchronous>, transform_indices = @transform_3, window_bounds = array<i64: 128, 256>}, {pipeline_mode = #tpu.pipeline_mode<synchronous>, transform_indices = @transform_4, window_bounds = array<i64: 4, 16, 256>}]} {
    %c0 = arith.constant 0 : index
    %c0_0 = arith.constant 0 : index
    %c0_1 = arith.constant 0 : index
    %0 = vector.load %arg1[%c0, %c0_0, %c0_1] : memref<4x16x128xf32, #tpu.memory_space<vmem>>, vector<4x16x128xf32>
    %c0_2 = arith.constant 0 : index
    %c0_3 = arith.constant 0 : index
    %c0_4 = arith.constant 0 : index
    %1 = vector.load %arg2[%c0_2, %c0_3, %c0_4] : memref<4x16x16xf32, #tpu.memory_space<vmem>>, vector<4x16x16xf32>
    %c0_5 = arith.constant 0 : index
    %c0_6 = arith.constant 0 : index
    %2 = vector.load %arg3[%c0_5, %c0_6] : memref<128x128xf32, #tpu.memory_space<vmem>>, vector<128x128xf32>
    %c0_7 = arith.constant 0 : index
    %c0_8 = arith.constant 0 : index
    %3 = vector.load %arg4[%c0_7, %c0_8] : memref<128x256xf32, #tpu.memory_space<vmem>>, vector<128x256xf32>
    %4 = vector.shape_cast %0 : vector<4x16x128xf32> to vector<64x128xf32>
    %cst = arith.constant dense<0.000000e+00> : vector<64x128xf32>
    %5 = tpu.matmul %4, %2, %cst {dimension_numbers = #tpu.dot_dimension_numbers<[1], [0], [0], [1], [0, 0, 1, 1], [], []>} : vector<64x128xf32>, vector<128x128xf32>, vector<64x128xf32> -> vector<64x128xf32>
    %6 = vector.shape_cast %5 : vector<64x128xf32> to vector<4x16x128xf32>
    "tpu.trace_start"() <{level = 10 : i32, message = "bij,bjh->bih"}> : () -> ()
    %cst_9 = arith.constant dense<0.000000e+00> : vector<4x16x128xf32>
    %7 = tpu.matmul %1, %6, %cst_9 {dimension_numbers = #tpu.dot_dimension_numbers<[2], [1], [1], [2], [0, 0, 0, 1, 1, 2], [0], [0]>} : vector<4x16x16xf32>, vector<4x16x128xf32>, vector<4x16x128xf32> -> vector<4x16x128xf32>
    "tpu.trace_stop"() : () -> ()
    %cst_10 = arith.constant 2.000000e-01 : f32
    %8 = vector.broadcast %cst_10 : f32 to vector<4x16x128xf32>
    %9 = arith.mulf %8, %7 : vector<4x16x128xf32>
    %10 = arith.maximumf %7, %9 : vector<4x16x128xf32>
    %11 = vector.shape_cast %10 : vector<4x16x128xf32> to vector<64x128xf32>
    %cst_11 = arith.constant dense<0.000000e+00> : vector<64x256xf32>
    %12 = tpu.matmul %11, %3, %cst_11 {dimension_numbers = #tpu.dot_dimension_numbers<[1], [0], [0], [1], [0, 0, 1, 1], [], []>} : vector<64x128xf32>, vector<128x256xf32>, vector<64x256xf32> -> vector<64x256xf32>
    %13 = vector.shape_cast %12 : vector<64x256xf32> to vector<4x16x256xf32>
    "tpu.trace_start"() <{level = 10 : i32, message = "bij,bjh->bih"}> : () -> ()
    %cst_12 = arith.constant dense<0.000000e+00> : vector<4x16x256xf32>
    %14 = tpu.matmul %1, %13, %cst_12 {dimension_numbers = #tpu.dot_dimension_numbers<[2], [1], [1], [2], [0, 0, 0, 1, 1, 2], [0], [0]>} : vector<4x16x16xf32>, vector<4x16x256xf32>, vector<4x16x256xf32> -> vector<4x16x256xf32>
    "tpu.trace_stop"() : () -> ()
    %15 = arith.mulf %14, %14 : vector<4x16x256xf32>
    %cst_13 = arith.constant dense<0.000000e+00> : vector<4x16xf32>
    %16 = vector.multi_reduction <add>, %15, %cst_13 [2] : vector<4x16x256xf32> to vector<4x16xf32>
    %17 = vector.shape_cast %16 : vector<4x16xf32> to vector<4x16x1xf32>
    %cst_14 = arith.constant 1.000000e-24 : f32
    %18 = vector.broadcast %cst_14 : f32 to vector<4x16x1xf32>
    %19 = arith.addf %17, %18 : vector<4x16x1xf32>
    %20 = math.rsqrt %19 : vector<4x16x1xf32>
    %21 = vector.broadcast %20 : vector<4x16x1xf32> to vector<4x16x256xf32>
    %22 = arith.mulf %14, %21 : vector<4x16x256xf32>
    %c0_15 = arith.constant 0 : index
    %c0_16 = arith.constant 0 : index
    %c0_17 = arith.constant 0 : index
    %23 = vector.load %arg5[%c0_15, %c0_16, %c0_17] : memref<4x16x256xf32, #tpu.memory_space<vmem>>, vector<4x16x256xf32>
    tpu.vector_store %arg5[%c0_15, %c0_16, %c0_17], %22 {strides = array<i32>} : memref<4x16x256xf32, #tpu.memory_space<vmem>>, vector<4x16x256xf32>,
    return
  }
  func.func @transform_0(%arg0: i32) -> (i32, i32, i32) {
    %c0_i32 = arith.constant 0 : i32
    %c0_i32_0 = arith.constant 0 : i32
    %c0_i32_1 = arith.constant 0 : i32
    %c0_i32_2 = arith.constant 0 : i32
    return %c0_i32, %c0_i32_0, %c0_i32_1 : i32, i32, i32
  }
  func.func @transform_1(%arg0: i32) -> (i32, i32, i32) {
    %c0_i32 = arith.constant 0 : i32
    %c0_i32_0 = arith.constant 0 : i32
    %c0_i32_1 = arith.constant 0 : i32
    %c0_i32_2 = arith.constant 0 : i32
    return %c0_i32, %c0_i32_0, %c0_i32_1 : i32, i32, i32
  }
  func.func @transform_2(%arg0: i32) -> (i32, i32) {
    %c0_i32 = arith.constant 0 : i32
    %c0_i32_0 = arith.constant 0 : i32
    %c0_i32_1 = arith.constant 0 : i32
    return %c0_i32, %c0_i32_0 : i32, i32
  }
  func.func @transform_3(%arg0: i32) -> (i32, i32) {
    %c0_i32 = arith.constant 0 : i32
    %c0_i32_0 = arith.constant 0 : i32
    %c0_i32_1 = arith.constant 0 : i32
    return %c0_i32, %c0_i32_0 : i32, i32
  }
  func.func @transform_4(%arg0: i32) -> (i32, i32, i32) {
    %c0_i32 = arith.constant 0 : i32
    %c0_i32_0 = arith.constant 0 : i32
    %c0_i32_1 = arith.constant 0 : i32
    %c0_i32_2 = arith.constant 0 : i32
    return %c0_i32, %c0_i32_0, %c0_i32_1 : i32, i32, i32
  }
}

</mosaic_0001>

<llo_original>
// kernel: tpu_custom_call.1
$region0: #{tpu_custom_call.1}
  #allocation0 [shape = 'u32[]', space=smem, size = 0x4, offset = 0x4, fixed_abs, tag = 'smem constant byte address 0x4 - core index']
  #allocation1 [shape = 'u32[144,128]{1,0:T(1,128)}', space=vmem, size = 0x12000, scoped, tag = 'internal scratch']
  %s0 = inlined_call_operand.hbm [shape: f32[4,16,128], index: 0, kind: input, shape index: {}]
  %s1 = inlined_call_operand.hbm [shape: f32[4,16,16], index: 1, kind: input, shape index: {}]
  %s2 = inlined_call_operand.hbm [shape: f32[128,128], index: 2, kind: input, shape index: {}]
  %s3 = inlined_call_operand.hbm [shape: f32[128,256], index: 3, kind: input, shape index: {}]
  %s4 = inlined_call_operand.hbm [shape: f32[4,16,256], index: 4, kind: output, shape index: {}]
  %s5 = sld [smem:[#allocation0]]
  $region42: #{tpu_custom_call.1} parent=0
    _
  %s7 = ssub.s32 1, %s5
  %s8 = scalar_select 0, %s7, %s5
  $region1: #{tpu_custom_call.1} parent=0
    #allocation2 [shape = 'u8[32768]{0}', space=vmem, size = 0x8000, scoped, tag = 'input window, operand 0, single buffered']
    #allocation3 [shape = 's32[1]{0}', space=sflag, size = 0x4, scoped, tag = 'scoped memory for tpu_custom_call.1']
    #allocation4 [shape = 's32[1]{0}', space=sflag, size = 0x4, scoped, tag = 'scoped memory for tpu_custom_call.1']
    #allocation5 [shape = 'u8[32768]{0}', space=vmem, size = 0x8000, scoped, tag = 'input window, operand 1, single buffered']
    #allocation6 [shape = 's32[1]{0}', space=sflag, size = 0x4, scoped, tag = 'scoped memory for tpu_custom_call.1']
    #allocation7 [shape = 'u8[65536]{0}', space=vmem, size = 0x10000, scoped, tag = 'input window, operand 2, single buffered']
    #allocation8 [shape = 'u8[131072]{0}', space=vmem, size = 0x20000, scoped, tag = 'input window, operand 3, single buffered']
    #allocation9 [shape = 's32[1]{0}', space=sflag, size = 0x4, scoped, tag = 'scoped memory for tpu_custom_call.1']
    #allocation10 [shape = 'u8[65536]{0}', space=vmem, size = 0x10000, scoped, tag = 'output window, operand 0, single buffered']
    %9 = vsyncpa [#allocation3], 0
    %10 = vsyncpa [#allocation6], 0
    %11 = vsyncpa [#allocation9], 0
    %12 = vsyncpa [#allocation4], 0
    // Predicated region
    $region2: #{tpu_custom_call.1} parent=1 // pred_check
      _
    $region3: #{tpu_custom_call.1} parent=1 // pred_check_branch
      %14 = sbr.rel (0) target = $region5
    $region4: #{tpu_custom_call.1} parent=1 // pred_region
      %s16 = ssub.s32 1024, 1024
      %17 = vsyncadd [#allocation3], %s16
      %s18 = sshll.u32 [#allocation2], 4
      %s19 = int_to_ptr.vmem [resolvable:$true] %s18
      %24 = dma.hbm_to_vmem [thread:$0]  %s0, 1024, %s19, [#allocation3], 128, 128, 8
    $region5: #{tpu_custom_call.1} parent=1 // pred_fallthru
      _
    // Predicated region
    $region6: #{tpu_custom_call.1} parent=1 // pred_check
      _
    $region7: #{tpu_custom_call.1} parent=1 // pred_check_branch
      %26 = sbr.rel (0) target = $region9
    $region8: #{tpu_custom_call.1} parent=1 // pred_region
      %s28 = ssub.s32 1024, 1024
      %29 = vsyncadd [#allocation6], %s28
      %s30 = sshll.u32 [#allocation5], 4
      %s31 = int_to_ptr.vmem [resolvable:$true] %s30
      %36 = dma.hbm_to_vmem [thread:$0]  %s1, 1024, %s31, [#allocation6], 128, 128, 8
    $region9: #{tpu_custom_call.1} parent=1 // pred_fallthru
      _
    // Predicated region
    $region10: #{tpu_custom_call.1} parent=1 // pred_check
      _
    $region11: #{tpu_custom_call.1} parent=1 // pred_check_branch
      %38 = sbr.rel (0) target = $region13
    $region12: #{tpu_custom_call.1} parent=1 // pred_region
      %s40 = ssub.s32 2048, 2048
      %41 = vsyncadd [#allocation6], %s40
      %s42 = sshll.u32 [#allocation7], 4
      %s43 = int_to_ptr.vmem [resolvable:$true] %s42
      %48 = dma.hbm_to_vmem [thread:$0]  %s2, 2048, %s43, [#allocation6], 128, 128, 8
    $region13: #{tpu_custom_call.1} parent=1 // pred_fallthru
      _
    // Predicated region
    $region14: #{tpu_custom_call.1} parent=1 // pred_check
      _
    $region15: #{tpu_custom_call.1} parent=1 // pred_check_branch
      %50 = sbr.rel (0) target = $region17
    $region16: #{tpu_custom_call.1} parent=1 // pred_region
      %s52 = ssub.s32 4096, 4096
      %53 = vsyncadd [#allocation9], %s52
      %s54 = sshll.u32 [#allocation8], 4
      %s55 = int_to_ptr.vmem [resolvable:$true] %s54
      %60 = dma.hbm_to_vmem [thread:$0]  %s3, 4096, %s55, [#allocation9], 256, 256, 16
    $region17: #{tpu_custom_call.1} parent=1 // pred_fallthru
      _
    // Predicated region
    $region18: #{tpu_custom_call.1} parent=1 // pred_check
      _
    $region19: #{tpu_custom_call.1} parent=1 // pred_check_branch
      %62 = sbr.rel (0) target = $region21
    $region20: #{tpu_custom_call.1} parent=1 // pred_region
      %63 = dma.done [#allocation3], 1024
    $region21: #{tpu_custom_call.1} parent=1 // pred_fallthru
      _
    // Predicated region
    $region22: #{tpu_custom_call.1} parent=1 // pred_check
      _
    $region23: #{tpu_custom_call.1} parent=1 // pred_check_branch
      %65 = sbr.rel (0) target = $region25
    $region24: #{tpu_custom_call.1} parent=1 // pred_region
      %66 = dma.done [#allocation6], 1024
    $region25: #{tpu_custom_call.1} parent=1 // pred_fallthru
      _
    // Predicated region
    $region26: #{tpu_custom_call.1} parent=1 // pred_check
      _
    $region27: #{tpu_custom_call.1} parent=1 // pred_check_branch
      %68 = sbr.rel (0) target = $region29
    $region28: #{tpu_custom_call.1} parent=1 // pred_region
      %69 = dma.done [#allocation6], 2048
    $region29: #{tpu_custom_call.1} parent=1 // pred_fallthru
      _
    // Predicated region
    $region30: #{tpu_custom_call.1} parent=1 // pred_check
      _
    $region31: #{tpu_custom_call.1} parent=1 // pred_check_branch
      %71 = sbr.rel (0) target = $region33
    $region32: #{tpu_custom_call.1} parent=1 // pred_region
      %72 = dma.done [#allocation9], 4096
    $region33: #{tpu_custom_call.1} parent=1 // pred_fallthru
      _
    %v73 = vld [vmem:[#allocation2] sm:$0xff]
    %v74 = vld [vmem:[#allocation2 + $0x8] sm:$0xff]
    %v75 = vld [vmem:[#allocation2 + $0x10] sm:$0xff]
    %v76 = vld [vmem:[#allocation2 + $0x18] sm:$0xff]
    %v77 = vld [vmem:[#allocation2 + $0x20] sm:$0xff]
    %v78 = vld [vmem:[#allocation2 + $0x28] sm:$0xff]
    %v79 = vld [vmem:[#allocation2 + $0x30] sm:$0xff]
    %v80 = vld [vmem:[#allocation2 + $0x38] sm:$0xff]
    %v81 = vld [vmem:[#allocation5] sm:$0xff]
    %v82 = vld [vmem:[#allocation5 + $0x8] sm:$0xff]
    %v83 = vld [vmem:[#allocation5 + $0x10] sm:$0xff]
    %v84 = vld [vmem:[#allocation5 + $0x18] sm:$0xff]
    %v85 = vld [vmem:[#allocation5 + $0x20] sm:$0xff]
    %v86 = vld [vmem:[#allocation5 + $0x28] sm:$0xff]
    %v87 = vld [vmem:[#allocation5 + $0x30] sm:$0xff]
    %v88 = vld [vmem:[#allocation5 + $0x38] sm:$0xff]
    %v89 = vld [vmem:[#allocation7] sm:$0xff]
    %v90 = vld [vmem:[#allocation7 + $0x8] sm:$0xff]
    %v91 = vld [vmem:[#allocation7 + $0x10] sm:$0xff]
    %v92 = vld [vmem:[#allocation7 + $0x18] sm:$0xff]
    %v93 = vld [vmem:[#allocation7 + $0x20] sm:$0xff]
    %v94 = vld [vmem:[#allocation7 + $0x28] sm:$0xff]
    %v95 = vld [vmem:[#allocation7 + $0x30] sm:$0xff]
    %v96 = vld [vmem:[#allocation7 + $0x38] sm:$0xff]
    %v97 = vld [vmem:[#allocation7 + $0x40] sm:$0xff]
    %v98 = vld [vmem:[#allocation7 + $0x48] sm:$0xff]
    %v99 = vld [vmem:[#allocation7 + $0x50] sm:$0xff]
    %v100 = vld [vmem:[#allocation7 + $0x58] sm:$0xff]
    %v101 = vld [vmem:[#allocation7 + $0x60] sm:$0xff]
    %v102 = vld [vmem:[#allocation7 + $0x68] sm:$0xff]
    %v103 = vld [vmem:[#allocation7 + $0x70] sm:$0xff]
    %v104 = vld [vmem:[#allocation7 + $0x78] sm:$0xff]
    %v105 = vld [vmem:[#allocation8] sm:$0xff]
    %v106 = vld [vmem:[#allocation8 + $0x8] sm:$0xff]
    %v107 = vld [vmem:[#allocation8 + $0x10] sm:$0xff]
    %v108 = vld [vmem:[#allocation8 + $0x18] sm:$0xff]
    %v109 = vld [vmem:[#allocation8 + $0x20] sm:$0xff]
    %v110 = vld [vmem:[#allocation8 + $0x28] sm:$0xff]
    %v111 = vld [vmem:[#allocation8 + $0x30] sm:$0xff]
    %v112 = vld [vmem:[#allocation8 + $0x38] sm:$0xff]
    %v113 = vld [vmem:[#allocation8 + $0x40] sm:$0xff]
    %v114 = vld [vmem:[#allocation8 + $0x48] sm:$0xff]
    %v115 = vld [vmem:[#allocation8 + $0x50] sm:$0xff]
    %v116 = vld [vmem:[#allocation8 + $0x58] sm:$0xff]
    %v117 = vld [vmem:[#allocation8 + $0x60] sm:$0xff]
    %v118 = vld [vmem:[#allocation8 + $0x68] sm:$0xff]
    %v119 = vld [vmem:[#allocation8 + $0x70] sm:$0xff]
    %v120 = vld [vmem:[#allocation8 + $0x78] sm:$0xff]
    %v121 = vld [vmem:[#allocation8 + $0x80] sm:$0xff]
    %v122 = vld [vmem:[#allocation8 + $0x88] sm:$0xff]
    %v123 = vld [vmem:[#allocation8 + $0x90] sm:$0xff]
    %v124 = vld [vmem:[#allocation8 + $0x98] sm:$0xff]
    %v125 = vld [vmem:[#allocation8 + $0xa0] sm:$0xff]
    %v126 = vld [vmem:[#allocation8 + $0xa8] sm:$0xff]
    %v127 = vld [vmem:[#allocation8 + $0xb0] sm:$0xff]
    %v128 = vld [vmem:[#allocation8 + $0xb8] sm:$0xff]
    %v129 = vld [vmem:[#allocation8 + $0xc0] sm:$0xff]
    %v130 = vld [vmem:[#allocation8 + $0xc8] sm:$0xff]
    %v131 = vld [vmem:[#allocation8 + $0xd0] sm:$0xff]
    %v132 = vld [vmem:[#allocation8 + $0xd8] sm:$0xff]
    %v133 = vld [vmem:[#allocation8 + $0xe0] sm:$0xff]
    %v134 = vld [vmem:[#allocation8 + $0xe8] sm:$0xff]
    %v135 = vld [vmem:[#allocation8 + $0xf0] sm:$0xff]
    %v136 = vld [vmem:[#allocation8 + $0xf8] sm:$0xff]
    %137 = vmatprep.subr.mxu0 0.0
    %138 = vmatpush1.msra.mxu0 %v104
    %139 = vmatprep.subr.mxu0 0.0
    %140 = vmatpush1.msra.mxu0 %v103
    %141 = vmatprep.subr.mxu0 0.0
    %142 = vmatpush1.msra.mxu0 %v102
    %143 = vmatprep.subr.mxu0 0.0
    %144 = vmatpush1.msra.mxu0 %v101
    %145 = vmatprep.subr.mxu0 0.0
    %146 = vmatpush1.msra.mxu0 %v100
    %147 = vmatprep.subr.mxu0 0.0
    %148 = vmatpush1.msra.mxu0 %v99
    %149 = vmatprep.subr.mxu0 0.0
    %150 = vmatpush1.msra.mxu0 %v98
    %151 = vmatprep.subr.mxu0 0.0
    %152 = vmatpush1.msra.mxu0 %v97
    %153 = vmatprep.subr.mxu0 0.0
    %154 = vmatpush1.msra.mxu0 %v96
    %155 = vmatprep.subr.mxu0 0.0
    %156 = vmatpush1.msra.mxu0 %v95
    %157 = vmatprep.subr.mxu0 0.0
    %158 = vmatpush1.msra.mxu0 %v94
    %159 = vmatprep.subr.mxu0 0.0
    %160 = vmatpush1.msra.mxu0 %v93
    %161 = vmatprep.subr.mxu0 0.0
    %162 = vmatpush1.msra.mxu0 %v92
    %163 = vmatprep.subr.mxu0 0.0
    %164 = vmatpush1.msra.mxu0 %v91
    %165 = vmatprep.subr.mxu0 0.0
    %166 = vmatpush1.msra.mxu0 %v90
    %167 = vmatprep.subr.mxu0 0.0
    %168 = vmatpush1.msra.mxu0 %v89
    %169 = vmatprep.subr.mxu0 0.0
    %170 = vmatpush2.msra.mxu0 0.0
    %171 = vmatprep.subr.mxu0 0.0
    %172 = vmatpush2.msra.mxu0 0.0
    %173 = vmatprep.subr.mxu0 0.0
    %174 = vmatpush2.msra.mxu0 0.0
    %175 = vmatprep.subr.mxu0 0.0
    %176 = vmatpush2.msra.mxu0 0.0
    %177 = vmatprep.subr.mxu0 0.0
    %178 = vmatpush2.msra.mxu0 0.0
    %179 = vmatprep.subr.mxu0 0.0
    %180 = vmatpush2.msra.mxu0 0.0
    %181 = vmatprep.subr.mxu0 0.0
    %182 = vmatpush2.msra.mxu0 0.0
    %183 = vmatprep.subr.mxu0 0.0
    %184 = vmatpush2.msra.mxu0 0.0
    %185 = vmatprep.subr.mxu0 0.0
    %186 = vmatpush2.msra.mxu0 0.0
    %187 = vmatprep.subr.mxu0 0.0
    %188 = vmatpush2.msra.mxu0 0.0
    %189 = vmatprep.subr.mxu0 0.0
    %190 = vmatpush2.msra.mxu0 0.0
    %191 = vmatprep.subr.mxu0 0.0
    %192 = vmatpush2.msra.mxu0 0.0
    %193 = vmatprep.subr.mxu0 0.0
    %194 = vmatpush2.msra.mxu0 0.0
    %195 = vmatprep.subr.mxu0 0.0
    %196 = vmatpush2.msra.mxu0 0.0
    %197 = vmatprep.subr.mxu0 0.0
    %198 = vmatpush2.msra.mxu0 0.0
    %199 = vmatprep.subr.mxu0 0.0
    %200 = vmatpush2.msra.mxu0 0.0
    %201 = vmatprep.mubr.f32.mxu0 0.0
    %202 = vmatmul.mubr.f32.gmra.mxu0 %v73
    %v203 = vpop.f32.mrf.mxu0
    %v204 = vadd.f32 0.0, %v203
    %v205 = vpop.f32.mrf.mxu0
    %206 = vmatprep.mubr.f32.mxu0 0.0
    %207 = vmatmul.mubr.f32.gmra.mxu0 %v74
    %v208 = vpop.f32.mrf.mxu0
    %v209 = vadd.f32 0.0, %v208
    %v210 = vpop.f32.mrf.mxu0
    %211 = vmatprep.mubr.f32.mxu0 0.0
    %212 = vmatmul.mubr.f32.gmra.mxu0 %v75
    %v213 = vpop.f32.mrf.mxu0
    %v214 = vadd.f32 0.0, %v213
    %v215 = vpop.f32.mrf.mxu0
    %216 = vmatprep.mubr.f32.mxu0 0.0
    %217 = vmatmul.mubr.f32.gmra.mxu0 %v76
    %v218 = vpop.f32.mrf.mxu0
    %v219 = vadd.f32 0.0, %v218
    %v220 = vpop.f32.mrf.mxu0
    %221 = vmatprep.mubr.f32.mxu0 0.0
    %222 = vmatmul.mubr.f32.gmra.mxu0 %v77
    %v223 = vpop.f32.mrf.mxu0
    %v224 = vadd.f32 0.0, %v223
    %v225 = vpop.f32.mrf.mxu0
    %226 = vmatprep.mubr.f32.mxu0 0.0
    %227 = vmatmul.mubr.f32.gmra.mxu0 %v78
    %v228 = vpop.f32.mrf.mxu0
    %v229 = vadd.f32 0.0, %v228
    %v230 = vpop.f32.mrf.mxu0
    %231 = vmatprep.mubr.f32.mxu0 0.0
    %232 = vmatmul.mubr.f32.gmra.mxu0 %v79
    %v233 = vpop.f32.mrf.mxu0
    %v234 = vadd.f32 0.0, %v233
    %v235 = vpop.f32.mrf.mxu0
    %236 = vmatprep.mubr.f32.mxu0 0.0
    %237 = vmatmul.mubr.f32.gmra.mxu0 %v80
    %v238 = vpop.f32.mrf.mxu0
    %v239 = vadd.f32 0.0, %v238
    %v240 = vpop.f32.mrf.mxu0
    %241 = vdwg.mxu0
    %vm242 = vcmask 130048
    %v244 = vsel %vm242, %v81, 0
    %v247 = vsel %vm242, %v82, 0
    %249 = vmatprep.subr.mxu0 0.0
    %250 = vmatpush1.msra.mxu0 0.0
    %251 = vmatprep.subr.mxu0 0.0
    %252 = vmatpush1.msra.mxu0 0.0
    %253 = vmatprep.subr.mxu0 0.0
    %254 = vmatpush1.msra.mxu0 0.0
    %255 = vmatprep.subr.mxu0 0.0
    %256 = vmatpush1.msra.mxu0 0.0
    %257 = vmatprep.subr.mxu0 0.0
    %258 = vmatpush1.msra.mxu0 0.0
    %259 = vmatprep.subr.mxu0 0.0
    %260 = vmatpush1.msra.mxu0 0.0
    %261 = vmatprep.subr.mxu0 0.0
    %262 = vmatpush1.msra.mxu0 0.0
    %263 = vmatprep.subr.mxu0 0.0
    %264 = vmatpush1.msra.mxu0 0.0
    %265 = vmatprep.subr.mxu0 0.0
    %266 = vmatpush1.msra.mxu0 0.0
    %267 = vmatprep.subr.mxu0 0.0
    %268 = vmatpush1.msra.mxu0 0.0
    %269 = vmatprep.subr.mxu0 0.0
    %270 = vmatpush1.msra.mxu0 0.0
    %271 = vmatprep.subr.mxu0 0.0
    %272 = vmatpush1.msra.mxu0 0.0
    %273 = vmatprep.subr.mxu0 0.0
    %274 = vmatpush1.msra.mxu0 0.0
    %275 = vmatprep.subr.mxu0 0.0
    %276 = vmatpush1.msra.mxu0 0.0
    %277 = vmatprep.subr.mxu0 0.0
    %278 = vmatpush1.msra.mxu0 %v209
    %279 = vmatprep.subr.mxu0 0.0
    %280 = vmatpush1.msra.mxu0 %v204
    %281 = vmatprep.subr.mxu0 0.0
    %282 = vmatpush2.msra.mxu0 0.0
    %283 = vmatprep.subr.mxu0 0.0
    %284 = vmatpush2.msra.mxu0 0.0
    %285 = vmatprep.subr.mxu0 0.0
    %286 = vmatpush2.msra.mxu0 0.0
    %287 = vmatprep.subr.mxu0 0.0
    %288 = vmatpush2.msra.mxu0 0.0
    %289 = vmatprep.subr.mxu0 0.0
    %290 = vmatpush2.msra.mxu0 0.0
    %291 = vmatprep.subr.mxu0 0.0
    %292 = vmatpush2.msra.mxu0 0.0
    %293 = vmatprep.subr.mxu0 0.0
    %294 = vmatpush2.msra.mxu0 0.0
    %295 = vmatprep.subr.mxu0 0.0
    %296 = vmatpush2.msra.mxu0 0.0
    %297 = vmatprep.subr.mxu0 0.0
    %298 = vmatpush2.msra.mxu0 0.0
    %299 = vmatprep.subr.mxu0 0.0
    %300 = vmatpush2.msra.mxu0 0.0
    %301 = vmatprep.subr.mxu0 0.0
    %302 = vmatpush2.msra.mxu0 0.0
    %303 = vmatprep.subr.mxu0 0.0
    %304 = vmatpush2.msra.mxu0 0.0
    %305 = vmatprep.subr.mxu0 0.0
    %306 = vmatpush2.msra.mxu0 0.0
    %307 = vmatprep.subr.mxu0 0.0
    %308 = vmatpush2.msra.mxu0 0.0
    %309 = vmatprep.subr.mxu0 0.0
    %310 = vmatpush2.msra.mxu0 0.0
    %311 = vmatprep.subr.mxu0 0.0
    %312 = vmatpush2.msra.mxu0 0.0
    %313 = vmatprep.mubr.f32.mxu0 0.0
    %314 = vmatmul.mubr.f32.gmra.mxu0 %v244
    %v315 = vpop.f32.mrf.mxu0
    %v316 = vadd.f32 0.0, %v315
    %v317 = vpop.f32.mrf.mxu0
    %318 = vmatprep.mubr.f32.mxu0 0.0
    %319 = vmatmul.mubr.f32.gmra.mxu0 %v247
    %v320 = vpop.f32.mrf.mxu0
    %v321 = vadd.f32 0.0, %v320
    %v322 = vpop.f32.mrf.mxu0
    %323 = vdwg.mxu0
    %v325 = vsel %vm242, %v83, 0
    %v328 = vsel %vm242, %v84, 0
    %330 = vmatprep.subr.mxu0 0.0
    %331 = vmatpush1.msra.mxu0 0.0
    %332 = vmatprep.subr.mxu0 0.0
    %333 = vmatpush1.msra.mxu0 0.0
    %334 = vmatprep.subr.mxu0 0.0
    %335 = vmatpush1.msra.mxu0 0.0
    %336 = vmatprep.subr.mxu0 0.0
    %337 = vmatpush1.msra.mxu0 0.0
    %338 = vmatprep.subr.mxu0 0.0
    %339 = vmatpush1.msra.mxu0 0.0
    %340 = vmatprep.subr.mxu0 0.0
    %341 = vmatpush1.msra.mxu0 0.0
    %342 = vmatprep.subr.mxu0 0.0
    %343 = vmatpush1.msra.mxu0 0.0
    %344 = vmatprep.subr.mxu0 0.0
    %345 = vmatpush1.msra.mxu0 0.0
    %346 = vmatprep.subr.mxu0 0.0
    %347 = vmatpush1.msra.mxu0 0.0
    %348 = vmatprep.subr.mxu0 0.0
    %349 = vmatpush1.msra.mxu0 0.0
    %350 = vmatprep.subr.mxu0 0.0
    %351 = vmatpush1.msra.mxu0 0.0
    %352 = vmatprep.subr.mxu0 0.0
    %353 = vmatpush1.msra.mxu0 0.0
    %354 = vmatprep.subr.mxu0 0.0
    %355 = vmatpush1.msra.mxu0 0.0
    %356 = vmatprep.subr.mxu0 0.0
    %357 = vmatpush1.msra.mxu0 0.0
    %358 = vmatprep.subr.mxu0 0.0
    %359 = vmatpush1.msra.mxu0 %v219
    %360 = vmatprep.subr.mxu0 0.0
    %361 = vmatpush1.msra.mxu0 %v214
    %362 = vmatprep.subr.mxu0 0.0
    %363 = vmatpush2.msra.mxu0 0.0
    %364 = vmatprep.subr.mxu0 0.0
    %365 = vmatpush2.msra.mxu0 0.0
    %366 = vmatprep.subr.mxu0 0.0
    %367 = vmatpush2.msra.mxu0 0.0
    %368 = vmatprep.subr.mxu0 0.0
    %369 = vmatpush2.msra.mxu0 0.0
    %370 = vmatprep.subr.mxu0 0.0
    %371 = vmatpush2.msra.mxu0 0.0
    %372 = vmatprep.subr.mxu0 0.0
    %373 = vmatpush2.msra.mxu0 0.0
    %374 = vmatprep.subr.mxu0 0.0
    %375 = vmatpush2.msra.mxu0 0.0
    %376 = vmatprep.subr.mxu0 0.0
    %377 = vmatpush2.msra.mxu0 0.0
    %378 = vmatprep.subr.mxu0 0.0
    %379 = vmatpush2.msra.mxu0 0.0
    %380 = vmatprep.subr.mxu0 0.0
    %381 = vmatpush2.msra.mxu0 0.0
    %382 = vmatprep.subr.mxu0 0.0
    %383 = vmatpush2.msra.mxu0 0.0
    %384 = vmatprep.subr.mxu0 0.0
    %385 = vmatpush2.msra.mxu0 0.0
    %386 = vmatprep.subr.mxu0 0.0
    %387 = vmatpush2.msra.mxu0 0.0
    %388 = vmatprep.subr.mxu0 0.0
    %389 = vmatpush2.msra.mxu0 0.0
    %390 = vmatprep.subr.mxu0 0.0
    %391 = vmatpush2.msra.mxu0 0.0
    %392 = vmatprep.subr.mxu0 0.0
    %393 = vmatpush2.msra.mxu0 0.0
    %394 = vmatprep.mubr.f32.mxu0 0.0
    %395 = vmatmul.mubr.f32.gmra.mxu0 %v325
    %v396 = vpop.f32.mrf.mxu0
    %v397 = vadd.f32 0.0, %v396
    %v398 = vpop.f32.mrf.mxu0
    %399 = vmatprep.mubr.f32.mxu0 0.0
    %400 = vmatmul.mubr.f32.gmra.mxu0 %v328
    %v401 = vpop.f32.mrf.mxu0
    %v402 = vadd.f32 0.0, %v401
    %v403 = vpop.f32.mrf.mxu0
    %404 = vdwg.mxu0
    %v406 = vsel %vm242, %v85, 0
    %v409 = vsel %vm242, %v86, 0
    %411 = vmatprep.subr.mxu0 0.0
    %412 = vmatpush1.msra.mxu0 0.0
    %413 = vmatprep.subr.mxu0 0.0
    %414 = vmatpush1.msra.mxu0 0.0
    %415 = vmatprep.subr.mxu0 0.0
    %416 = vmatpush1.msra.mxu0 0.0
    %417 = vmatprep.subr.mxu0 0.0
    %418 = vmatpush1.msra.mxu0 0.0
    %419 = vmatprep.subr.mxu0 0.0
    %420 = vmatpush1.msra.mxu0 0.0
    %421 = vmatprep.subr.mxu0 0.0
    %422 = vmatpush1.msra.mxu0 0.0
    %423 = vmatprep.subr.mxu0 0.0
    %424 = vmatpush1.msra.mxu0 0.0
    %425 = vmatprep.subr.mxu0 0.0
    %426 = vmatpush1.msra.mxu0 0.0
    %427 = vmatprep.subr.mxu0 0.0
    %428 = vmatpush1.msra.mxu0 0.0
    %429 = vmatprep.subr.mxu0 0.0
    %430 = vmatpush1.msra.mxu0 0.0
    %431 = vmatprep.subr.mxu0 0.0
    %432 = vmatpush1.msra.mxu0 0.0
    %433 = vmatprep.subr.mxu0 0.0
    %434 = vmatpush1.msra.mxu0 0.0
    %435 = vmatprep.subr.mxu0 0.0
    %436 = vmatpush1.msra.mxu0 0.0
    %437 = vmatprep.subr.mxu0 0.0
    %438 = vmatpush1.msra.mxu0 0.0
    %439 = vmatprep.subr.mxu0 0.0
    %440 = vmatpush1.msra.mxu0 %v229
    %441 = vmatprep.subr.mxu0 0.0
    %442 = vmatpush1.msra.mxu0 %v224
    %443 = vmatprep.subr.mxu0 0.0
    %444 = vmatpush2.msra.mxu0 0.0
    %445 = vmatprep.subr.mxu0 0.0
    %446 = vmatpush2.msra.mxu0 0.0
    %447 = vmatprep.subr.mxu0 0.0
    %448 = vmatpush2.msra.mxu0 0.0
    %449 = vmatprep.subr.mxu0 0.0
    %450 = vmatpush2.msra.mxu0 0.0
    %451 = vmatprep.subr.mxu0 0.0
    %452 = vmatpush2.msra.mxu0 0.0
    %453 = vmatprep.subr.mxu0 0.0
    %454 = vmatpush2.msra.mxu0 0.0
    %455 = vmatprep.subr.mxu0 0.0
    %456 = vmatpush2.msra.mxu0 0.0
    %457 = vmatprep.subr.mxu0 0.0
    %458 = vmatpush2.msra.mxu0 0.0
    %459 = vmatprep.subr.mxu0 0.0
    %460 = vmatpush2.msra.mxu0 0.0
    %461 = vmatprep.subr.mxu0 0.0
    %462 = vmatpush2.msra.mxu0 0.0
    %463 = vmatprep.subr.mxu0 0.0
    %464 = vmatpush2.msra.mxu0 0.0
    %465 = vmatprep.subr.mxu0 0.0
    %466 = vmatpush2.msra.mxu0 0.0
    %467 = vmatprep.subr.mxu0 0.0
    %468 = vmatpush2.msra.mxu0 0.0
    %469 = vmatprep.subr.mxu0 0.0
    %470 = vmatpush2.msra.mxu0 0.0
    %471 = vmatprep.subr.mxu0 0.0
    %472 = vmatpush2.msra.mxu0 0.0
    %473 = vmatprep.subr.mxu0 0.0
    %474 = vmatpush2.msra.mxu0 0.0
    %475 = vmatprep.mubr.f32.mxu0 0.0
    %476 = vmatmul.mubr.f32.gmra.mxu0 %v406
    %v477 = vpop.f32.mrf.mxu0
    %v478 = vadd.f32 0.0, %v477
    %v479 = vpop.f32.mrf.mxu0
    %480 = vmatprep.mubr.f32.mxu0 0.0
    %481 = vmatmul.mubr.f32.gmra.mxu0 %v409
    %v482 = vpop.f32.mrf.mxu0
    %v483 = vadd.f32 0.0, %v482
    %v484 = vpop.f32.mrf.mxu0
    %485 = vdwg.mxu0
    %v487 = vsel %vm242, %v87, 0
    %v490 = vsel %vm242, %v88, 0
    %492 = vmatprep.subr.mxu0 0.0
    %493 = vmatpush1.msra.mxu0 0.0
    %494 = vmatprep.subr.mxu0 0.0
    %495 = vmatpush1.msra.mxu0 0.0
    %496 = vmatprep.subr.mxu0 0.0
    %497 = vmatpush1.msra.mxu0 0.0
    %498 = vmatprep.subr.mxu0 0.0
    %499 = vmatpush1.msra.mxu0 0.0
    %500 = vmatprep.subr.mxu0 0.0
    %501 = vmatpush1.msra.mxu0 0.0
    %502 = vmatprep.subr.mxu0 0.0
    %503 = vmatpush1.msra.mxu0 0.0
    %504 = vmatprep.subr.mxu0 0.0
    %505 = vmatpush1.msra.mxu0 0.0
    %506 = vmatprep.subr.mxu0 0.0
    %507 = vmatpush1.msra.mxu0 0.0
    %508 = vmatprep.subr.mxu0 0.0
    %509 = vmatpush1.msra.mxu0 0.0
    %510 = vmatprep.subr.mxu0 0.0
    %511 = vmatpush1.msra.mxu0 0.0
    %512 = vmatprep.subr.mxu0 0.0
    %513 = vmatpush1.msra.mxu0 0.0
    %514 = vmatprep.subr.mxu0 0.0
    %515 = vmatpush1.msra.mxu0 0.0
    %516 = vmatprep.subr.mxu0 0.0
    %517 = vmatpush1.msra.mxu0 0.0
    %518 = vmatprep.subr.mxu0 0.0
    %519 = vmatpush1.msra.mxu0 0.0
    %520 = vmatprep.subr.mxu0 0.0
    %521 = vmatpush1.msra.mxu0 %v239
    %522 = vmatprep.subr.mxu0 0.0
    %523 = vmatpush1.msra.mxu0 %v234
    %524 = vmatprep.subr.mxu0 0.0
    %525 = vmatpush2.msra.mxu0 0.0
    %526 = vmatprep.subr.mxu0 0.0
    %527 = vmatpush2.msra.mxu0 0.0
    %528 = vmatprep.subr.mxu0 0.0
    %529 = vmatpush2.msra.mxu0 0.0
    %530 = vmatprep.subr.mxu0 0.0
    %531 = vmatpush2.msra.mxu0 0.0
    %532 = vmatprep.subr.mxu0 0.0
    %533 = vmatpush2.msra.mxu0 0.0
    %534 = vmatprep.subr.mxu0 0.0
    %535 = vmatpush2.msra.mxu0 0.0
    %536 = vmatprep.subr.mxu0 0.0
    %537 = vmatpush2.msra.mxu0 0.0
    %538 = vmatprep.subr.mxu0 0.0
    %539 = vmatpush2.msra.mxu0 0.0
    %540 = vmatprep.subr.mxu0 0.0
    %541 = vmatpush2.msra.mxu0 0.0
    %542 = vmatprep.subr.mxu0 0.0
    %543 = vmatpush2.msra.mxu0 0.0
    %544 = vmatprep.subr.mxu0 0.0
    %545 = vmatpush2.msra.mxu0 0.0
    %546 = vmatprep.subr.mxu0 0.0
    %547 = vmatpush2.msra.mxu0 0.0
    %548 = vmatprep.subr.mxu0 0.0
    %549 = vmatpush2.msra.mxu0 0.0
    %550 = vmatprep.subr.mxu0 0.0
    %551 = vmatpush2.msra.mxu0 0.0
    %552 = vmatprep.subr.mxu0 0.0
    %553 = vmatpush2.msra.mxu0 0.0
    %554 = vmatprep.subr.mxu0 0.0
    %555 = vmatpush2.msra.mxu0 0.0
    %556 = vmatprep.mubr.f32.mxu0 0.0
    %557 = vmatmul.mubr.f32.gmra.mxu0 %v487
    %v558 = vpop.f32.mrf.mxu0
    %v559 = vadd.f32 0.0, %v558
    %v560 = vpop.f32.mrf.mxu0
    %561 = vmatprep.mubr.f32.mxu0 0.0
    %562 = vmatmul.mubr.f32.gmra.mxu0 %v490
    %v563 = vpop.f32.mrf.mxu0
    %v564 = vadd.f32 0.0, %v563
    %v565 = vpop.f32.mrf.mxu0
    %566 = vdwg.mxu0
    %v567 = vmul.f32 %v316, 0.2
    %v568 = vmul.f32 %v321, 0.2
    %v569 = vmul.f32 %v397, 0.2
    %v570 = vmul.f32 %v402, 0.2
    %v571 = vmul.f32 %v478, 0.2
    %v572 = vmul.f32 %v483, 0.2
    %v573 = vmul.f32 %v559, 0.2
    %v574 = vmul.f32 %v564, 0.2
    %v575 = vmax.f32 %v316, %v567
    %v576 = vmax.f32 %v321, %v568
    %v577 = vmax.f32 %v397, %v569
    %v578 = vmax.f32 %v402, %v570
    %v579 = vmax.f32 %v478, %v571
    %v580 = vmax.f32 %v483, %v572
    %v581 = vmax.f32 %v559, %v573
    %v582 = vmax.f32 %v564, %v574
    %583 = vmatprep.subr.mxu0 %v136
    %584 = vmatpush1.msra.mxu0 %v135
    %585 = vmatprep.subr.mxu0 %v134
    %586 = vmatpush1.msra.mxu0 %v133
    %587 = vmatprep.subr.mxu0 %v132
    %588 = vmatpush1.msra.mxu0 %v131
    %589 = vmatprep.subr.mxu0 %v130
    %590 = vmatpush1.msra.mxu0 %v129
    %591 = vmatprep.subr.mxu0 %v128
    %592 = vmatpush1.msra.mxu0 %v127
    %593 = vmatprep.subr.mxu0 %v126
    %594 = vmatpush1.msra.mxu0 %v125
    %595 = vmatprep.subr.mxu0 %v124
    %596 = vmatpush1.msra.mxu0 %v123
    %597 = vmatprep.subr.mxu0 %v122
    %598 = vmatpush1.msra.mxu0 %v121
    %599 = vmatprep.subr.mxu0 %v120
    %600 = vmatpush1.msra.mxu0 %v119
    %601 = vmatprep.subr.mxu0 %v118
    %602 = vmatpush1.msra.mxu0 %v117
    %603 = vmatprep.subr.mxu0 %v116
    %604 = vmatpush1.msra.mxu0 %v115
    %605 = vmatprep.subr.mxu0 %v114
    %606 = vmatpush1.msra.mxu0 %v113
    %607 = vmatprep.subr.mxu0 %v112
    %608 = vmatpush1.msra.mxu0 %v111
    %609 = vmatprep.subr.mxu0 %v110
    %610 = vmatpush1.msra.mxu0 %v109
    %611 = vmatprep.subr.mxu0 %v108
    %612 = vmatpush1.msra.mxu0 %v107
    %613 = vmatprep.subr.mxu0 %v106
    %614 = vmatpush1.msra.mxu0 %v105
    %615 = vmatprep.subr.mxu0 0.0
    %616 = vmatpush2.msra.mxu0 0.0
    %617 = vmatprep.subr.mxu0 0.0
    %618 = vmatpush2.msra.mxu0 0.0
    %619 = vmatprep.subr.mxu0 0.0
    %620 = vmatpush2.msra.mxu0 0.0
    %621 = vmatprep.subr.mxu0 0.0
    %622 = vmatpush2.msra.mxu0 0.0
    %623 = vmatprep.subr.mxu0 0.0
    %624 = vmatpush2.msra.mxu0 0.0
    %625 = vmatprep.subr.mxu0 0.0
    %626 = vmatpush2.msra.mxu0 0.0
    %627 = vmatprep.subr.mxu0 0.0
    %628 = vmatpush2.msra.mxu0 0.0
    %629 = vmatprep.subr.mxu0 0.0
    %630 = vmatpush2.msra.mxu0 0.0
    %631 = vmatprep.subr.mxu0 0.0
    %632 = vmatpush2.msra.mxu0 0.0
    %633 = vmatprep.subr.mxu0 0.0
    %634 = vmatpush2.msra.mxu0 0.0
    %635 = vmatprep.subr.mxu0 0.0
    %636 = vmatpush2.msra.mxu0 0.0
    %637 = vmatprep.subr.mxu0 0.0
    %638 = vmatpush2.msra.mxu0 0.0
    %639 = vmatprep.subr.mxu0 0.0
    %640 = vmatpush2.msra.mxu0 0.0
    %641 = vmatprep.subr.mxu0 0.0
    %642 = vmatpush2.msra.mxu0 0.0
    %643 = vmatprep.subr.mxu0 0.0
    %644 = vmatpush2.msra.mxu0 0.0
    %645 = vmatprep.subr.mxu0 0.0
    %646 = vmatpush2.msra.mxu0 0.0
    %647 = vmatprep.mubr.f32.mxu0 0.0
    %648 = vmatmul.mubr.f32.gmra.mxu0 %v575
    %v649 = vpop.f32.mrf.mxu0
    %v650 = vadd.f32 0.0, %v649
    %v651 = vpop.f32.mrf.mxu0
    %v652 = vadd.f32 0.0, %v651
    %653 = vmatprep.mubr.f32.mxu0 0.0
    %654 = vmatmul.mubr.f32.gmra.mxu0 %v576
    %v655 = vpop.f32.mrf.mxu0
    %v656 = vadd.f32 0.0, %v655
    %v657 = vpop.f32.mrf.mxu0
    %v658 = vadd.f32 0.0, %v657
    %659 = vmatprep.mubr.f32.mxu0 0.0
    %660 = vmatmul.mubr.f32.gmra.mxu0 %v577
    %v661 = vpop.f32.mrf.mxu0
    %v662 = vadd.f32 0.0, %v661
    %v663 = vpop.f32.mrf.mxu0
    %v664 = vadd.f32 0.0, %v663
    %665 = vmatprep.mubr.f32.mxu0 0.0
    %666 = vmatmul.mubr.f32.gmra.mxu0 %v578
    %v667 = vpop.f32.mrf.mxu0
    %v668 = vadd.f32 0.0, %v667
    %v669 = vpop.f32.mrf.mxu0
    %v670 = vadd.f32 0.0, %v669
    %671 = vmatprep.mubr.f32.mxu0 0.0
    %672 = vmatmul.mubr.f32.gmra.mxu0 %v579
    %v673 = vpop.f32.mrf.mxu0
    %v674 = vadd.f32 0.0, %v673
    %v675 = vpop.f32.mrf.mxu0
    %v676 = vadd.f32 0.0, %v675
    %677 = vmatprep.mubr.f32.mxu0 0.0
    %678 = vmatmul.mubr.f32.gmra.mxu0 %v580
    %v679 = vpop.f32.mrf.mxu0
    %v680 = vadd.f32 0.0, %v679
    %v681 = vpop.f32.mrf.mxu0
    %v682 = vadd.f32 0.0, %v681
    %683 = vmatprep.mubr.f32.mxu0 0.0
    %684 = vmatmul.mubr.f32.gmra.mxu0 %v581
    %v685 = vpop.f32.mrf.mxu0
    %v686 = vadd.f32 0.0, %v685
    %v687 = vpop.f32.mrf.mxu0
    %v688 = vadd.f32 0.0, %v687
    %689 = vmatprep.mubr.f32.mxu0 0.0
    %690 = vmatmul.mubr.f32.gmra.mxu0 %v582
    %v691 = vpop.f32.mrf.mxu0
    %v692 = vadd.f32 0.0, %v691
    %v693 = vpop.f32.mrf.mxu0
    %v694 = vadd.f32 0.0, %v693
    %695 = vdwg.mxu0
    %696 = vmatprep.subr.mxu0 0.0
    %697 = vmatpush1.msra.mxu0 0.0
    %698 = vmatprep.subr.mxu0 0.0
    %699 = vmatpush1.msra.mxu0 0.0
    %700 = vmatprep.subr.mxu0 0.0
    %701 = vmatpush1.msra.mxu0 0.0
    %702 = vmatprep.subr.mxu0 0.0
    %703 = vmatpush1.msra.mxu0 0.0
    %704 = vmatprep.subr.mxu0 0.0
    %705 = vmatpush1.msra.mxu0 0.0
    %706 = vmatprep.subr.mxu0 0.0
    %707 = vmatpush1.msra.mxu0 0.0
    %708 = vmatprep.subr.mxu0 0.0
    %709 = vmatpush1.msra.mxu0 0.0
    %710 = vmatprep.subr.mxu0 0.0
    %711 = vmatpush1.msra.mxu0 0.0
    %712 = vmatprep.subr.mxu0 0.0
    %713 = vmatpush1.msra.mxu0 0.0
    %714 = vmatprep.subr.mxu0 0.0
    %715 = vmatpush1.msra.mxu0 0.0
    %716 = vmatprep.subr.mxu0 0.0
    %717 = vmatpush1.msra.mxu0 0.0
    %718 = vmatprep.subr.mxu0 0.0
    %719 = vmatpush1.msra.mxu0 0.0
    %720 = vmatprep.subr.mxu0 0.0
    %721 = vmatpush1.msra.mxu0 0.0
    %722 = vmatprep.subr.mxu0 0.0
    %723 = vmatpush1.msra.mxu0 0.0
    %724 = vmatprep.subr.mxu0 %v658
    %725 = vmatpush1.msra.mxu0 %v656
    %726 = vmatprep.subr.mxu0 %v652
    %727 = vmatpush1.msra.mxu0 %v650
    %728 = vmatprep.subr.mxu0 0.0
    %729 = vmatpush2.msra.mxu0 0.0
    %730 = vmatprep.subr.mxu0 0.0
    %731 = vmatpush2.msra.mxu0 0.0
    %732 = vmatprep.subr.mxu0 0.0
    %733 = vmatpush2.msra.mxu0 0.0
    %734 = vmatprep.subr.mxu0 0.0
    %735 = vmatpush2.msra.mxu0 0.0
    %736 = vmatprep.subr.mxu0 0.0
    %737 = vmatpush2.msra.mxu0 0.0
    %738 = vmatprep.subr.mxu0 0.0
    %739 = vmatpush2.msra.mxu0 0.0
    %740 = vmatprep.subr.mxu0 0.0
    %741 = vmatpush2.msra.mxu0 0.0
    %742 = vmatprep.subr.mxu0 0.0
    %743 = vmatpush2.msra.mxu0 0.0
    %744 = vmatprep.subr.mxu0 0.0
    %745 = vmatpush2.msra.mxu0 0.0
    %746 = vmatprep.subr.mxu0 0.0
    %747 = vmatpush2.msra.mxu0 0.0
    %748 = vmatprep.subr.mxu0 0.0
    %749 = vmatpush2.msra.mxu0 0.0
    %750 = vmatprep.subr.mxu0 0.0
    %751 = vmatpush2.msra.mxu0 0.0
    %752 = vmatprep.subr.mxu0 0.0
    %753 = vmatpush2.msra.mxu0 0.0
    %754 = vmatprep.subr.mxu0 0.0
    %755 = vmatpush2.msra.mxu0 0.0
    %756 = vmatprep.subr.mxu0 0.0
    %757 = vmatpush2.msra.mxu0 0.0
    %758 = vmatprep.subr.mxu0 0.0
    %759 = vmatpush2.msra.mxu0 0.0
    %760 = vmatprep.mubr.f32.mxu0 0.0
    %761 = vmatmul.mubr.f32.gmra.mxu0 %v244
    %v762 = vpop.f32.mrf.mxu0
    %v763 = vadd.f32 0.0, %v762
    %v764 = vpop.f32.mrf.mxu0
    %v765 = vadd.f32 0.0, %v764
    %766 = vmatprep.mubr.f32.mxu0 0.0
    %767 = vmatmul.mubr.f32.gmra.mxu0 %v247
    %v768 = vpop.f32.mrf.mxu0
    %v769 = vadd.f32 0.0, %v768
    %v770 = vpop.f32.mrf.mxu0
    %v771 = vadd.f32 0.0, %v770
    %772 = vdwg.mxu0
    %773 = vmatprep.subr.mxu0 0.0
    %774 = vmatpush1.msra.mxu0 0.0
    %775 = vmatprep.subr.mxu0 0.0
    %776 = vmatpush1.msra.mxu0 0.0
    %777 = vmatprep.subr.mxu0 0.0
    %778 = vmatpush1.msra.mxu0 0.0
    %779 = vmatprep.subr.mxu0 0.0
    %780 = vmatpush1.msra.mxu0 0.0
    %781 = vmatprep.subr.mxu0 0.0
    %782 = vmatpush1.msra.mxu0 0.0
    %783 = vmatprep.subr.mxu0 0.0
    %784 = vmatpush1.msra.mxu0 0.0
    %785 = vmatprep.subr.mxu0 0.0
    %786 = vmatpush1.msra.mxu0 0.0
    %787 = vmatprep.subr.mxu0 0.0
    %788 = vmatpush1.msra.mxu0 0.0
    %789 = vmatprep.subr.mxu0 0.0
    %790 = vmatpush1.msra.mxu0 0.0
    %791 = vmatprep.subr.mxu0 0.0
    %792 = vmatpush1.msra.mxu0 0.0
    %793 = vmatprep.subr.mxu0 0.0
    %794 = vmatpush1.msra.mxu0 0.0
    %795 = vmatprep.subr.mxu0 0.0
    %796 = vmatpush1.msra.mxu0 0.0
    %797 = vmatprep.subr.mxu0 0.0
    %798 = vmatpush1.msra.mxu0 0.0
    %799 = vmatprep.subr.mxu0 0.0
    %800 = vmatpush1.msra.mxu0 0.0
    %801 = vmatprep.subr.mxu0 %v670
    %802 = vmatpush1.msra.mxu0 %v668
    %803 = vmatprep.subr.mxu0 %v664
    %804 = vmatpush1.msra.mxu0 %v662
    %805 = vmatprep.subr.mxu0 0.0
    %806 = vmatpush2.msra.mxu0 0.0
    %807 = vmatprep.subr.mxu0 0.0
    %808 = vmatpush2.msra.mxu0 0.0
    %809 = vmatprep.subr.mxu0 0.0
    %810 = vmatpush2.msra.mxu0 0.0
    %811 = vmatprep.subr.mxu0 0.0
    %812 = vmatpush2.msra.mxu0 0.0
    %813 = vmatprep.subr.mxu0 0.0
    %814 = vmatpush2.msra.mxu0 0.0
    %815 = vmatprep.subr.mxu0 0.0
    %816 = vmatpush2.msra.mxu0 0.0
    %817 = vmatprep.subr.mxu0 0.0
    %818 = vmatpush2.msra.mxu0 0.0
    %819 = vmatprep.subr.mxu0 0.0
    %820 = vmatpush2.msra.mxu0 0.0
    %821 = vmatprep.subr.mxu0 0.0
    %822 = vmatpush2.msra.mxu0 0.0
    %823 = vmatprep.subr.mxu0 0.0
    %824 = vmatpush2.msra.mxu0 0.0
    %825 = vmatprep.subr.mxu0 0.0
    %826 = vmatpush2.msra.mxu0 0.0
    %827 = vmatprep.subr.mxu0 0.0
    %828 = vmatpush2.msra.mxu0 0.0
    %829 = vmatprep.subr.mxu0 0.0
    %830 = vmatpush2.msra.mxu0 0.0
    %831 = vmatprep.subr.mxu0 0.0
    %832 = vmatpush2.msra.mxu0 0.0
    %833 = vmatprep.subr.mxu0 0.0
    %834 = vmatpush2.msra.mxu0 0.0
    %835 = vmatprep.subr.mxu0 0.0
    %836 = vmatpush2.msra.mxu0 0.0
    %837 = vmatprep.mubr.f32.mxu0 0.0
    %838 = vmatmul.mubr.f32.gmra.mxu0 %v325
    %v839 = vpop.f32.mrf.mxu0
    %v840 = vadd.f32 0.0, %v839
    %v841 = vpop.f32.mrf.mxu0
    %v842 = vadd.f32 0.0, %v841
    %843 = vmatprep.mubr.f32.mxu0 0.0
    %844 = vmatmul.mubr.f32.gmra.mxu0 %v328
    %v845 = vpop.f32.mrf.mxu0
    %v846 = vadd.f32 0.0, %v845
    %v847 = vpop.f32.mrf.mxu0
    %v848 = vadd.f32 0.0, %v847
    %849 = vdwg.mxu0
    %850 = vmatprep.subr.mxu0 0.0
    %851 = vmatpush1.msra.mxu0 0.0
    %852 = vmatprep.subr.mxu0 0.0
    %853 = vmatpush1.msra.mxu0 0.0
    %854 = vmatprep.subr.mxu0 0.0
    %855 = vmatpush1.msra.mxu0 0.0
    %856 = vmatprep.subr.mxu0 0.0
    %857 = vmatpush1.msra.mxu0 0.0
    %858 = vmatprep.subr.mxu0 0.0
    %859 = vmatpush1.msra.mxu0 0.0
    %860 = vmatprep.subr.mxu0 0.0
    %861 = vmatpush1.msra.mxu0 0.0
    %862 = vmatprep.subr.mxu0 0.0
    %863 = vmatpush1.msra.mxu0 0.0
    %864 = vmatprep.subr.mxu0 0.0
    %865 = vmatpush1.msra.mxu0 0.0
    %866 = vmatprep.subr.mxu0 0.0
    %867 = vmatpush1.msra.mxu0 0.0
    %868 = vmatprep.subr.mxu0 0.0
    %869 = vmatpush1.msra.mxu0 0.0
    %870 = vmatprep.subr.mxu0 0.0
    %871 = vmatpush1.msra.mxu0 0.0
    %872 = vmatprep.subr.mxu0 0.0
    %873 = vmatpush1.msra.mxu0 0.0
    %874 = vmatprep.subr.mxu0 0.0
    %875 = vmatpush1.msra.mxu0 0.0
    %876 = vmatprep.subr.mxu0 0.0
    %877 = vmatpush1.msra.mxu0 0.0
    %878 = vmatprep.subr.mxu0 %v682
    %879 = vmatpush1.msra.mxu0 %v680
    %880 = vmatprep.subr.mxu0 %v676
    %881 = vmatpush1.msra.mxu0 %v674
    %882 = vmatprep.subr.mxu0 0.0
    %883 = vmatpush2.msra.mxu0 0.0
    %884 = vmatprep.subr.mxu0 0.0
    %885 = vmatpush2.msra.mxu0 0.0
    %886 = vmatprep.subr.mxu0 0.0
    %887 = vmatpush2.msra.mxu0 0.0
    %888 = vmatprep.subr.mxu0 0.0
    %889 = vmatpush2.msra.mxu0 0.0
    %890 = vmatprep.subr.mxu0 0.0
    %891 = vmatpush2.msra.mxu0 0.0
    %892 = vmatprep.subr.mxu0 0.0
    %893 = vmatpush2.msra.mxu0 0.0
    %894 = vmatprep.subr.mxu0 0.0
    %895 = vmatpush2.msra.mxu0 0.0
    %896 = vmatprep.subr.mxu0 0.0
    %897 = vmatpush2.msra.mxu0 0.0
    %898 = vmatprep.subr.mxu0 0.0
    %899 = vmatpush2.msra.mxu0 0.0
    %900 = vmatprep.subr.mxu0 0.0
    %901 = vmatpush2.msra.mxu0 0.0
    %902 = vmatprep.subr.mxu0 0.0
    %903 = vmatpush2.msra.mxu0 0.0
    %904 = vmatprep.subr.mxu0 0.0
    %905 = vmatpush2.msra.mxu0 0.0
    %906 = vmatprep.subr.mxu0 0.0
    %907 = vmatpush2.msra.mxu0 0.0
    %908 = vmatprep.subr.mxu0 0.0
    %909 = vmatpush2.msra.mxu0 0.0
    %910 = vmatprep.subr.mxu0 0.0
    %911 = vmatpush2.msra.mxu0 0.0
    %912 = vmatprep.subr.mxu0 0.0
    %913 = vmatpush2.msra.mxu0 0.0
    %914 = vmatprep.mubr.f32.mxu0 0.0
    %915 = vmatmul.mubr.f32.gmra.mxu0 %v406
    %v916 = vpop.f32.mrf.mxu0
    %v917 = vadd.f32 0.0, %v916
    %v918 = vpop.f32.mrf.mxu0
    %v919 = vadd.f32 0.0, %v918
    %920 = vmatprep.mubr.f32.mxu0 0.0
    %921 = vmatmul.mubr.f32.gmra.mxu0 %v409
    %v922 = vpop.f32.mrf.mxu0
    %v923 = vadd.f32 0.0, %v922
    %v924 = vpop.f32.mrf.mxu0
    %v925 = vadd.f32 0.0, %v924
    %926 = vdwg.mxu0
    %927 = vmatprep.subr.mxu0 0.0
    %928 = vmatpush1.msra.mxu0 0.0
    %929 = vmatprep.subr.mxu0 0.0
    %930 = vmatpush1.msra.mxu0 0.0
    %931 = vmatprep.subr.mxu0 0.0
    %932 = vmatpush1.msra.mxu0 0.0
    %933 = vmatprep.subr.mxu0 0.0
    %934 = vmatpush1.msra.mxu0 0.0
    %935 = vmatprep.subr.mxu0 0.0
    %936 = vmatpush1.msra.mxu0 0.0
    %937 = vmatprep.subr.mxu0 0.0
    %938 = vmatpush1.msra.mxu0 0.0
    %939 = vmatprep.subr.mxu0 0.0
    %940 = vmatpush1.msra.mxu0 0.0
    %941 = vmatprep.subr.mxu0 0.0
    %942 = vmatpush1.msra.mxu0 0.0
    %943 = vmatprep.subr.mxu0 0.0
    %944 = vmatpush1.msra.mxu0 0.0
    %945 = vmatprep.subr.mxu0 0.0
    %946 = vmatpush1.msra.mxu0 0.0
    %947 = vmatprep.subr.mxu0 0.0
    %948 = vmatpush1.msra.mxu0 0.0
    %949 = vmatprep.subr.mxu0 0.0
    %950 = vmatpush1.msra.mxu0 0.0
    %951 = vmatprep.subr.mxu0 0.0
    %952 = vmatpush1.msra.mxu0 0.0
    %953 = vmatprep.subr.mxu0 0.0
    %954 = vmatpush1.msra.mxu0 0.0
    %955 = vmatprep.subr.mxu0 %v694
    %956 = vmatpush1.msra.mxu0 %v692
    %957 = vmatprep.subr.mxu0 %v688
    %958 = vmatpush1.msra.mxu0 %v686
    %959 = vmatprep.subr.mxu0 0.0
    %960 = vmatpush2.msra.mxu0 0.0
    %961 = vmatprep.subr.mxu0 0.0
    %962 = vmatpush2.msra.mxu0 0.0
    %963 = vmatprep.subr.mxu0 0.0
    %964 = vmatpush2.msra.mxu0 0.0
    %965 = vmatprep.subr.mxu0 0.0
    %966 = vmatpush2.msra.mxu0 0.0
    %967 = vmatprep.subr.mxu0 0.0
    %968 = vmatpush2.msra.mxu0 0.0
    %969 = vmatprep.subr.mxu0 0.0
    %970 = vmatpush2.msra.mxu0 0.0
    %971 = vmatprep.subr.mxu0 0.0
    %972 = vmatpush2.msra.mxu0 0.0
    %973 = vmatprep.subr.mxu0 0.0
    %974 = vmatpush2.msra.mxu0 0.0
    %975 = vmatprep.subr.mxu0 0.0
    %976 = vmatpush2.msra.mxu0 0.0
    %977 = vmatprep.subr.mxu0 0.0
    %978 = vmatpush2.msra.mxu0 0.0
    %979 = vmatprep.subr.mxu0 0.0
    %980 = vmatpush2.msra.mxu0 0.0
    %981 = vmatprep.subr.mxu0 0.0
    %982 = vmatpush2.msra.mxu0 0.0
    %983 = vmatprep.subr.mxu0 0.0
    %984 = vmatpush2.msra.mxu0 0.0
    %985 = vmatprep.subr.mxu0 0.0
    %986 = vmatpush2.msra.mxu0 0.0
    %987 = vmatprep.subr.mxu0 0.0
    %988 = vmatpush2.msra.mxu0 0.0
    %989 = vmatprep.subr.mxu0 0.0
    %990 = vmatpush2.msra.mxu0 0.0
    %991 = vmatprep.mubr.f32.mxu0 0.0
    %992 = vmatmul.mubr.f32.gmra.mxu0 %v487
    %v993 = vpop.f32.mrf.mxu0
    %v994 = vadd.f32 0.0, %v993
    %v995 = vpop.f32.mrf.mxu0
    %v996 = vadd.f32 0.0, %v995
    %997 = vmatprep.mubr.f32.mxu0 0.0
    %998 = vmatmul.mubr.f32.gmra.mxu0 %v490
    %v999 = vpop.f32.mrf.mxu0
    %v1000 = vadd.f32 0.0, %v999
    %v1001 = vpop.f32.mrf.mxu0
    %v1002 = vadd.f32 0.0, %v1001
    %1003 = vdwg.mxu0
    %v1004 = vmul.f32 %v763, %v763
    %v1005 = vmul.f32 %v765, %v765
    %v1006 = vmul.f32 %v769, %v769
    %v1007 = vmul.f32 %v771, %v771
    %v1008 = vmul.f32 %v840, %v840
    %v1009 = vmul.f32 %v842, %v842
    %v1010 = vmul.f32 %v846, %v846
    %v1011 = vmul.f32 %v848, %v848
    %v1012 = vmul.f32 %v917, %v917
    %v1013 = vmul.f32 %v919, %v919
    %v1014 = vmul.f32 %v923, %v923
    %v1015 = vmul.f32 %v925, %v925
    %v1016 = vmul.f32 %v994, %v994
    %v1017 = vmul.f32 %v996, %v996
    %v1018 = vmul.f32 %v1000, %v1000
    %v1019 = vmul.f32 %v1002, %v1002
    %v1020 = vadd.f32 %v1004, %v1005
    %1021 = vadd.xlane.f32.xlu0 %v1020
    %v1022 = vpop.xlane.xlu0 %1021
    %v1023 = vadd.f32 %v1006, %v1007
    %1024 = vadd.xlane.f32.xlu0 %v1023
    %v1025 = vpop.xlane.xlu0 %1024
    %v1026 = vadd.f32 %v1008, %v1009
    %1027 = vadd.xlane.f32.xlu0 %v1026
    %v1028 = vpop.xlane.xlu0 %1027
    %v1029 = vadd.f32 %v1010, %v1011
    %1030 = vadd.xlane.f32.xlu0 %v1029
    %v1031 = vpop.xlane.xlu0 %1030
    %v1032 = vadd.f32 %v1012, %v1013
    %1033 = vadd.xlane.f32.xlu0 %v1032
    %v1034 = vpop.xlane.xlu0 %1033
    %v1035 = vadd.f32 %v1014, %v1015
    %1036 = vadd.xlane.f32.xlu0 %v1035
    %v1037 = vpop.xlane.xlu0 %1036
    %v1038 = vadd.f32 %v1016, %v1017
    %1039 = vadd.xlane.f32.xlu0 %v1038
    %v1040 = vpop.xlane.xlu0 %1039
    %v1041 = vadd.f32 %v1018, %v1019
    %1042 = vadd.xlane.f32.xlu0 %v1041
    %v1043 = vpop.xlane.xlu0 %1042
    %v1044 = vadd.f32 %v1022, 1e-24
    %v1045 = vadd.f32 %v1025, 1e-24
    %v1046 = vadd.f32 %v1028, 1e-24
    %v1047 = vadd.f32 %v1031, 1e-24
    %v1048 = vadd.f32 %v1034, 1e-24
    %v1049 = vadd.f32 %v1037, 1e-24
    %v1050 = vadd.f32 %v1040, 1e-24
    %v1051 = vadd.f32 %v1043, 1e-24
    %v1052 = vrsqrt.pop %v1044
    %v1053 = vrsqrt.pop %v1045
    %v1054 = vrsqrt.pop %v1046
    %v1055 = vrsqrt.pop %v1047
    %v1056 = vrsqrt.pop %v1048
    %v1057 = vrsqrt.pop %v1049
    %v1058 = vrsqrt.pop %v1050
    %v1059 = vrsqrt.pop %v1051
    %v1060 = vmul.f32 %v763, %v1052
    %v1061 = vmul.f32 %v765, %v1052
    %v1062 = vmul.f32 %v769, %v1053
    %v1063 = vmul.f32 %v771, %v1053
    %v1064 = vmul.f32 %v840, %v1054
    %v1065 = vmul.f32 %v842, %v1054
    %v1066 = vmul.f32 %v846, %v1055
    %v1067 = vmul.f32 %v848, %v1055
    %v1068 = vmul.f32 %v917, %v1056
    %v1069 = vmul.f32 %v919, %v1056
    %v1070 = vmul.f32 %v923, %v1057
    %v1071 = vmul.f32 %v925, %v1057
    %v1072 = vmul.f32 %v994, %v1058
    %v1073 = vmul.f32 %v996, %v1058
    %v1074 = vmul.f32 %v1000, %v1059
    %v1075 = vmul.f32 %v1002, %v1059
    %1076 = vst [vmem:[#allocation10] sm:$0xff] %v1060
    %1077 = vst [vmem:[#allocation10 + $0x8] sm:$0xff] %v1061
    %1078 = vst [vmem:[#allocation10 + $0x10] sm:$0xff] %v1062
    %1079 = vst [vmem:[#allocation10 + $0x18] sm:$0xff] %v1063
    %1080 = vst [vmem:[#allocation10 + $0x20] sm:$0xff] %v1064
    %1081 = vst [vmem:[#allocation10 + $0x28] sm:$0xff] %v1065
    %1082 = vst [vmem:[#allocation10 + $0x30] sm:$0xff] %v1066
    %1083 = vst [vmem:[#allocation10 + $0x38] sm:$0xff] %v1067
    %1084 = vst [vmem:[#allocation10 + $0x40] sm:$0xff] %v1068
    %1085 = vst [vmem:[#allocation10 + $0x48] sm:$0xff] %v1069
    %1086 = vst [vmem:[#allocation10 + $0x50] sm:$0xff] %v1070
    %1087 = vst [vmem:[#allocation10 + $0x58] sm:$0xff] %v1071
    %1088 = vst [vmem:[#allocation10 + $0x60] sm:$0xff] %v1072
    %1089 = vst [vmem:[#allocation10 + $0x68] sm:$0xff] %v1073
    %1090 = vst [vmem:[#allocation10 + $0x70] sm:$0xff] %v1074
    %1091 = vst [vmem:[#allocation10 + $0x78] sm:$0xff] %v1075
    // Predicated region
    $region34: #{tpu_custom_call.1} parent=1 // pred_check
      _
    $region35: #{tpu_custom_call.1} parent=1 // pred_check_branch
      %1093 = sbr.rel (0) target = $region37
    $region36: #{tpu_custom_call.1} parent=1 // pred_region
      %s1095 = ssub.s32 2048, 2048
      %1096 = vsyncadd [#allocation4], %s1095
      %s1097 = sshll.u32 [#allocation10], 4
      %s1098 = int_to_ptr.vmem [resolvable:$true] %s1097
      %1103 = dma.vmem_to_hbm [thread:$0]  %s1098, 2048, %s4, [#allocation4], 256, 256, 16
    $region37: #{tpu_custom_call.1} parent=1 // pred_fallthru
      _
    // Predicated region
    $region38: #{tpu_custom_call.1} parent=1 // pred_check
      _
    $region39: #{tpu_custom_call.1} parent=1 // pred_check_branch
      %1105 = sbr.rel (0) target = $region41
    $region40: #{tpu_custom_call.1} parent=1 // pred_region
      %1106 = dma.done [#allocation4], 2048
    $region41: #{tpu_custom_call.1} parent=1 // pred_fallthru
      _
    %1107 = vsyncpa [#allocation3], 1
    %1108 = vsyncpa [#allocation6], 1
    %1109 = vsyncpa [#allocation9], 1
    %1110 = vsyncpa [#allocation4], 1

</llo_original>
